<compile_context>
chip_gen: v5e
topology: v5e:2x2
jax: 0.10.0
libtpu: 0.0.40
codegen_flags: <defaults>
</compile_context>

<pallas_src>
import functools

import jax
import jax.numpy as jnp
import numpy as np
from jax import lax
from jax.experimental import pallas as pl
from jax.experimental.pallas import tpu as pltpu


def plane_block_kernel(x_ref, s1_ref, t1_ref, w1f_ref, t2f_ref,
                       w2c_ref, m_ref, bf_ref, out_ref,
                       ap1_ref, ap2_ref, *, W, PAD):
    # Per grid step:
    #   x_ref:   (1, Cin, L)           channel-major activations, L = lane-padded nb*H*W
    #   w1f_ref: (Cout, 9*Cin)         conv1 weights (tap-major K) with bn2 scale folded
    #   t2f_ref: (Cout, 1)             folded bn2 shift (b1*s2 + t2)
    #   w2c_ref: (Cout, 9*Cout + Cin)  [conv2 weights | folded 1x1 downsample weights]
    #   m_ref:   (9, L)                per-tap in-image validity (shared by both convs)
    #   bf_ref:  (Cout, 1)             folded final shift (b2 + bd*sd + td)
    #   ap1/ap2: (C, 2*PAD + L)        flat padded scratch; interior at lane offset PAD
    x = x_ref[0]                                   # (Cin, L)
    L = x.shape[1]
    m = m_ref[...]                                 # (9, L)

    # Zero the scratch halos every step (cheap: a handful of vregs).  The halo is read
    # by the shifted tap slices and neutralised by a mask *multiply*, so it must hold
    # finite values; zeroing only at program_id==0 would be unsafe when the "parallel"
    # grid axis is sharded across TensorCores (each core has its own scratch copy).
    z1 = jnp.zeros((ap1_ref.shape[0], PAD), jnp.float32)
    ap1_ref[:, :PAD] = z1
    ap1_ref[:, PAD + L:] = z1
    z2 = jnp.zeros((ap2_ref.shape[0], PAD), jnp.float32)
    ap2_ref[:, :PAD] = z2
    ap2_ref[:, PAD + L:] = z2

    def tap_parts(a, apad_ref):
        # Write `a` once into the lane-aligned interior of the padded scratch, then read
        # the 9 taps as lane-shifted slices.  Out-of-image / row-wrap positions are
        # zeroed per part by a (1, L) mask-row multiply (sublane broadcast).
        apad_ref[:, PAD:PAD + L] = a
        parts = []
        for kh in range(3):
            for kw in range(3):
                t = kh * 3 + kw
                d = (kh - 1) * W + (kw - 1)
                if d == 0:
                    parts.append(a)                                   # centre tap: always valid
                else:
                    parts.append(apad_ref[:, PAD + d:PAD + d + L] * m[t:t + 1, :])
        return parts

    # ---- bn1 + relu (the residual / downsample branch uses the raw x) ----
    a1 = jnp.maximum(x * s1_ref[...] + t1_ref[...], 0.0)

    # ---- conv1 (3x3, pad 1, +b1) -> bn2 -> relu : one im2col matmul, BN folded ----
    p1 = jnp.concatenate(tap_parts(a1, ap1_ref), axis=0)              # (9*Cin, L)
    h1 = jnp.dot(w1f_ref[...], p1, preferred_element_type=jnp.float32)
    a2 = jnp.maximum(h1 + t2f_ref[...], 0.0)
    # Dropout2d(0.5) -> identity in eval mode.

    # ---- conv2 (3x3) fused with the 1x1 downsample: a single MXU matmul over
    #      [9 conv2 taps of a2 ; raw x rows]  against  w2c = [w2 | wd*sd] ----
    p2 = jnp.concatenate(tap_parts(a2, ap2_ref) + [x], axis=0)        # (9*Cout + Cin, L)
    out = jnp.dot(w2c_ref[...], p2, preferred_element_type=jnp.float32) + bf_ref[...]
    out_ref[0] = out.astype(out_ref.dtype)


def _tap_masks(nb, H, W, L):
    """(9, L) float32: row t = 1.0 where tap (kh, kw) reads a valid in-image pixel.
    Shared by both convs (the mask does not depend on the channel)."""
    HW = H * W
    y = np.arange(HW) // W
    x = np.arange(HW) % W
    rows = []
    for kh in range(3):
        for kw in range(3):
            dh, dw = kh - 1, kw - 1
            valid = (y + dh >= 0) & (y + dh < H) & (x + dw >= 0) & (x + dw < W)
            rows.append(valid.astype(np.float32))
    m = np.tile(np.stack(rows, 0), (1, nb))            # (9, nb*HW)
    if m.shape[1] < L:                                 # lane-padded tail: never valid
        m = np.pad(m, ((0, 0), (0, L - m.shape[1])))
    return jnp.asarray(m)


def _pick_nb(N, HW, Cin, Cout, budget_bytes=10 << 20):
    """Largest divisor of N whose per-step working set fits the VMEM budget, capped so
    G = N/nb >= 2 (keeps the second TensorCore busy on v7x)."""
    per_image = 4 * HW * (2 * Cin + 2 * Cout           # double-buffered x / out blocks
                          + Cin + Cout                 # padded-scratch interiors
                          + 9 * Cin                    # conv1 im2col patches
                          + 9 * Cout + Cin             # fused conv2 + shortcut patches
                          + 4 * (Cin + Cout) + 18)     # value temps + tap mask
    nb = max(1, min(N, budget_bytes // max(per_image, 1)))
    if N >= 2:
        nb = min(nb, max(1, N // 2))                   # G >= 2
    while N % nb:
        nb -= 1
    return nb


def plane_block(x, p, nb=None):
    """x: (N, Cin, H, W) float32 (NCHW, like PyTorch). Returns (N, Cout, H, W)."""
    # TODO(synk): stride != 1 is not implemented (kernel assumes stride=1, padding=1).
    N, Cin, H, W = x.shape
    Cout = p["w1"].shape[-1]
    HW = H * W

    if nb is None:
        nb = _pick_nb(N, HW, Cin, Cout)
    G = N // nb
    L0 = nb * HW
    L = ((L0 + 127) // 128) * 128             # lane-dense (unmasked vst) output stores
    PAD = ((W + 1 + 127) // 128) * 128        # lane-aligned halo pad (>= W+1)

    # channel-major, lane-dense layout: (G, C, L)   (wrapper-side layout plumbing)
    xk = x.reshape(G, nb, Cin, HW).transpose(0, 2, 1, 3).reshape(G, Cin, L0)
    if L != L0:
        xk = jnp.pad(xk, ((0, 0), (0, 0), (0, L - L0)))

    # ---- fold BatchNorm / biases into weights and per-channel shifts ----
    s1 = p["s1"].reshape(Cin, 1)
    t1 = p["t1"].reshape(Cin, 1)
    w1f = jnp.transpose(p["w1"], (3, 0, 1, 2)).reshape(Cout, 9 * Cin) * p["s2"][:, None]
    t2f = (p["b1"] * p["s2"] + p["t2"]).reshape(Cout, 1)
    w2r = jnp.transpose(p["w2"], (3, 0, 1, 2)).reshape(Cout, 9 * Cout)
    if p.get("wd") is not None:               # downsample branch (1x1 conv + BN, folded)
        wdf = p["wd"].T * p["sd"][:, None]
        bf = (p["b2"] + p["bd"] * p["sd"] + p["td"]).reshape(Cout, 1)
    else:                                     # identity shortcut (requires Cin == Cout)
        wdf = jnp.eye(Cout, dtype=jnp.float32)
        bf = p["b2"].reshape(Cout, 1)
    w2c = jnp.concatenate([w2r, wdf], axis=1)          # (Cout, 9*Cout + Cin)

    m = _tap_masks(nb, H, W, L)                        # (9, L)

    def inv(shape):                           # grid-invariant operand
        nd = len(shape)
        return pl.BlockSpec(shape, lambda g, _nd=nd: (0,) * _nd)
        # (pl.Buffered(1) omitted: without the replicated masks these total a few KiB.)

    grid_spec = pltpu.PrefetchScalarGridSpec(
        num_scalar_prefetch=0,
        grid=(G,),
        in_specs=[
            pl.BlockSpec((1, Cin, L), lambda g: (g, 0, 0)),     # x
            inv((Cin, 1)), inv((Cin, 1)),                       # s1, t1
            inv((Cout, 9 * Cin)), inv((Cout, 1)),               # w1f, t2f
            inv((Cout, 9 * Cout + Cin)), inv((9, L)),           # w2c, tap mask
            inv((Cout, 1)),                                     # bf
        ],
        out_specs=pl.BlockSpec((1, Cout, L), lambda g: (g, 0, 0)),
        scratch_shapes=[
            pltpu.VMEM((Cin, 2 * PAD + L), jnp.float32),
            pltpu.VMEM((Cout, 2 * PAD + L), jnp.float32),
        ],
    )

    # Advisory hints for XLA scheduling + explicit VMEM limit for the picked tile.
    flops = 2 * G * L * Cout * (9 * Cin + 9 * Cout + Cin)
    bytes_accessed = 4 * (G * Cin * L + G * Cout * L + 9 * L
                          + Cout * (9 * Cin + 9 * Cout + Cin) + 2 * Cin + 3 * Cout)
    per_step_bytes = 4 * (2 * Cin * L + 2 * Cout * L
                          + Cin * (2 * PAD + L) + Cout * (2 * PAD + L)
                          + 2 * 9 * L
                          + (9 * Cin + 9 * Cout + Cin) * L
                          + 4 * (Cin + Cout) * L)
    vmem_limit = int(min(max(2 * per_step_bytes, 16 << 20), 32 << 20))

    out = pl.pallas_call(
        functools.partial(plane_block_kernel, W=W, PAD=PAD),
        out_shape=jax.ShapeDtypeStruct((G, Cout, L), jnp.float32),
        grid_spec=grid_spec,
        compiler_params=pltpu.CompilerParams(
            dimension_semantics=("parallel",),          # batch-block axis
            vmem_limit_bytes=vmem_limit),
        cost_estimate=pl.CostEstimate(flops=int(flops), transcendentals=0,
                                      bytes_accessed=int(bytes_accessed)),
    )(xk, s1, t1, w1f, t2f, w2c, m, bf)

    out = out[:, :, :L0]
    return out.reshape(G, Cout, nb, HW).transpose(0, 2, 1, 3).reshape(N, Cout, H, W)


def bn_fold(gamma, beta, mean, var, eps=1e-5):
    scale = gamma / jnp.sqrt(var + eps)
    shift = beta - mean * scale
    return scale, shift


def make_params(inplane, outplane, key):
    ks = jax.random.split(key, 16)
    u = lambda k, s, lo, hi: jax.random.uniform(k, s, jnp.float32, lo, hi)
    n = lambda k, s, sc: sc * jax.random.normal(k, s, jnp.float32)

    # conv weights in HWIO
    w1 = n(ks[0], (3, 3, inplane, outplane), 0.2)
    b1 = n(ks[1], (outplane,), 0.1)
    w2 = n(ks[2], (3, 3, outplane, outplane), 0.2)
    b2 = n(ks[3], (outplane,), 0.1)
    wd = n(ks[4], (inplane, outplane), 0.2)          # 1x1 downsample conv
    bd = n(ks[5], (outplane,), 0.1)

    # BatchNorm params (eval-mode running stats)
    s1, t1 = bn_fold(u(ks[6], (inplane,), 0.8, 1.2), n(ks[7], (inplane,), 0.1),
                     n(ks[8], (inplane,), 0.1), u(ks[9], (inplane,), 0.5, 1.5))
    s2, t2 = bn_fold(u(ks[10], (outplane,), 0.8, 1.2), n(ks[11], (outplane,), 0.1),
                     n(ks[12], (outplane,), 0.1), u(ks[13], (outplane,), 0.5, 1.5))
    sd, td = bn_fold(jnp.ones((outplane,)), jnp.zeros((outplane,)),
                     n(ks[14], (outplane,), 0.1), u(ks[15], (outplane,), 0.5, 1.5))

    return dict(w1=w1, b1=b1, w2=w2, b2=b2, wd=wd, bd=bd,
                s1=s1, t1=t1, s2=s2, t2=t2, sd=sd, td=td)


def ref_forward(x_nhwc, p):
    """Pure-JAX reference (same math as the PyTorch module in eval mode), NHWC."""
    dn = ("NHWC", "HWIO", "NHWC")
    a = jnp.maximum(x_nhwc * p["s1"] + p["t1"], 0.0)
    out = lax.conv_general_dilated(a, p["w1"], (1, 1), "SAME",
                                   dimension_numbers=dn,
                                   precision=lax.Precision.HIGHEST) + p["b1"]
    out = jnp.maximum(out * p["s2"] + p["t2"], 0.0)
    out = lax.conv_general_dilated(out, p["w2"], (1, 1), "SAME",
                                   dimension_numbers=dn,
                                   precision=lax.Precision.HIGHEST) + p["b2"]
    ident = jnp.einsum("nhwc,cd->nhwd", x_nhwc, p["wd"],
                       precision=lax.Precision.HIGHEST) + p["bd"]
    ident = ident * p["sd"] + p["td"]
    return out + ident


if __name__ == "__main__":
    N, H, W = 2, 16, 16
    inplane, outplane = 4, 8          # inplane != outplane -> downsample branch active

    key = jax.random.PRNGKey(0)
    kx, kp = jax.random.split(key)
    x_nchw = jax.random.normal(kx, (N, inplane, H, W), jnp.float32)   # PyTorch NCHW
    params = make_params(inplane, outplane, kp)

    out = plane_block(x_nchw, params)
    out = jax.block_until_ready(out)

    x_nhwc = jnp.transpose(x_nchw, (0, 2, 3, 1))
    ref = jnp.transpose(ref_forward(x_nhwc, params), (0, 3, 1, 2))

    assert out.shape == (N, outplane, H, W)
    assert jnp.allclose(out, ref, rtol=1e-3, atol=1e-3), (
        float(jnp.max(jnp.abs(out - ref))))

    print("KERNEL_OK")
</pallas_src>

<mosaic_0001>
module attributes {stable_mosaic.version = 11 : i64} {
  func.func @plane_block_kernel(%arg0: i32, %arg1: memref<1x4x256xf32, #tpu.memory_space<vmem>>, %arg2: memref<4x1xf32, #tpu.memory_space<vmem>>, %arg3: memref<4x1xf32, #tpu.memory_space<vmem>>, %arg4: memref<8x36xf32, #tpu.memory_space<vmem>>, %arg5: memref<8x1xf32, #tpu.memory_space<vmem>>, %arg6: memref<8x76xf32, #tpu.memory_space<vmem>>, %arg7: memref<9x256xf32, #tpu.memory_space<vmem>>, %arg8: memref<8x1xf32, #tpu.memory_space<vmem>>, %arg9: memref<1x8x256xf32, #tpu.memory_space<vmem>>, %arg10: memref<4x512xf32, #tpu.memory_space<vmem>>, %arg11: memref<8x512xf32, #tpu.memory_space<vmem>>) attributes {dimension_semantics = [#tpu.dimension_semantics<parallel>], iteration_bounds = array<i64: 2>, scalar_prefetch = 0 : i64, scratch_operands = 2 : i64, tpu.core_type = #tpu.core_type<tc>, window_params = [{transform_indices = @transform_0, window_bounds = array<i64: 1, 4, 256>}, {pipeline_mode = #tpu.pipeline_mode<synchronous>, transform_indices = @transform_1, window_bounds = array<i64: 4, 1>}, {pipeline_mode = #tpu.pipeline_mode<synchronous>, transform_indices = @transform_2, window_bounds = array<i64: 4, 1>}, {pipeline_mode = #tpu.pipeline_mode<synchronous>, transform_indices = @transform_3, window_bounds = array<i64: 8, 36>}, {pipeline_mode = #tpu.pipeline_mode<synchronous>, transform_indices = @transform_4, window_bounds = array<i64: 8, 1>}, {pipeline_mode = #tpu.pipeline_mode<synchronous>, transform_indices = @transform_5, window_bounds = array<i64: 8, 76>}, {pipeline_mode = #tpu.pipeline_mode<synchronous>, transform_indices = @transform_6, window_bounds = array<i64: 9, 256>}, {pipeline_mode = #tpu.pipeline_mode<synchronous>, transform_indices = @transform_7, window_bounds = array<i64: 8, 1>}, {transform_indices = @transform_8, window_bounds = array<i64: 1, 8, 256>}]} {
    %c0 = arith.constant 0 : index
    %c0_0 = arith.constant 0 : index
    %c0_1 = arith.constant 0 : index
    %0 = vector.load %arg1[%c0, %c0_0, %c0_1] : memref<1x4x256xf32, #tpu.memory_space<vmem>>, vector<1x4x256xf32>
    %1 = vector.shape_cast %0 : vector<1x4x256xf32> to vector<4x256xf32>
    %c0_2 = arith.constant 0 : index
    %c0_3 = arith.constant 0 : index
    %2 = vector.load %arg7[%c0_2, %c0_3] : memref<9x256xf32, #tpu.memory_space<vmem>>, vector<9x256xf32>
    %cst = arith.constant 0.000000e+00 : f32
    %3 = vector.broadcast %cst : f32 to vector<4x128xf32>
    %c0_4 = arith.constant 0 : index
    %c0_5 = arith.constant 0 : index
    %4 = vector.load %arg10[%c0_4, %c0_5] : memref<4x512xf32, #tpu.memory_space<vmem>>, vector<4x128xf32>
    tpu.vector_store %arg10[%c0_4, %c0_5], %3 {strides = array<i32>} : memref<4x512xf32, #tpu.memory_space<vmem>>, vector<4x128xf32>,
    %c0_6 = arith.constant 0 : index
    %c384 = arith.constant 384 : index
    %5 = vector.load %arg10[%c0_6, %c384] : memref<4x512xf32, #tpu.memory_space<vmem>>, vector<4x128xf32>
    tpu.vector_store %arg10[%c0_6, %c384], %3 {strides = array<i32>} : memref<4x512xf32, #tpu.memory_space<vmem>>, vector<4x128xf32>,
    %cst_7 = arith.constant 0.000000e+00 : f32
    %6 = vector.broadcast %cst_7 : f32 to vector<8x128xf32>
    %c0_8 = arith.constant 0 : index
    %c0_9 = arith.constant 0 : index
    %7 = vector.load %arg11[%c0_8, %c0_9] : memref<8x512xf32, #tpu.memory_space<vmem>>, vector<8x128xf32>
    tpu.vector_store %arg11[%c0_8, %c0_9], %6 {strides = array<i32>} : memref<8x512xf32, #tpu.memory_space<vmem>>, vector<8x128xf32>,
    %c0_10 = arith.constant 0 : index
    %c384_11 = arith.constant 384 : index
    %8 = vector.load %arg11[%c0_10, %c384_11] : memref<8x512xf32, #tpu.memory_space<vmem>>, vector<8x128xf32>
    tpu.vector_store %arg11[%c0_10, %c384_11], %6 {strides = array<i32>} : memref<8x512xf32, #tpu.memory_space<vmem>>, vector<8x128xf32>,
    %c0_12 = arith.constant 0 : index
    %c0_13 = arith.constant 0 : index
    %9 = vector.load %arg2[%c0_12, %c0_13] : memref<4x1xf32, #tpu.memory_space<vmem>>, vector<4x1xf32>
    %10 = vector.broadcast %9 : vector<4x1xf32> to vector<4x256xf32>
    %11 = arith.mulf %1, %10 : vector<4x256xf32>
    %c0_14 = arith.constant 0 : index
    %c0_15 = arith.constant 0 : index
    %12 = vector.load %arg3[%c0_14, %c0_15] : memref<4x1xf32, #tpu.memory_space<vmem>>, vector<4x1xf32>
    %13 = vector.broadcast %12 : vector<4x1xf32> to vector<4x256xf32>
    %14 = arith.addf %11, %13 : vector<4x256xf32>
    %cst_16 = arith.constant 0.000000e+00 : f32
    %15 = vector.broadcast %cst_16 : f32 to vector<4x256xf32>
    %16 = arith.maximumf %14, %15 : vector<4x256xf32>
    %c0_17 = arith.constant 0 : index
    %c128 = arith.constant 128 : index
    %17 = vector.load %arg10[%c0_17, %c128] : memref<4x512xf32, #tpu.memory_space<vmem>>, vector<4x256xf32>
    tpu.vector_store %arg10[%c0_17, %c128], %16 {strides = array<i32>} : memref<4x512xf32, #tpu.memory_space<vmem>>, vector<4x256xf32>,
    %c0_18 = arith.constant 0 : index
    %c111 = arith.constant 111 : index
    %18 = vector.load %arg10[%c0_18, %c111] : memref<4x512xf32, #tpu.memory_space<vmem>>, vector<4x256xf32>
    %19 = vector.extract_strided_slice %2 {offsets = [0, 0], sizes = [1, 256], strides = [1, 1]} : vector<9x256xf32> to vector<1x256xf32>
    %20 = vector.broadcast %19 : vector<1x256xf32> to vector<4x256xf32>
    %21 = arith.mulf %18, %20 : vector<4x256xf32>
    %c0_19 = arith.constant 0 : index
    %c112 = arith.constant 112 : index
    %22 = vector.load %arg10[%c0_19, %c112] : memref<4x512xf32, #tpu.memory_space<vmem>>, vector<4x256xf32>
    %23 = vector.extract_strided_slice %2 {offsets = [1, 0], sizes = [1, 256], strides = [1, 1]} : vector<9x256xf32> to vector<1x256xf32>
    %24 = vector.broadcast %23 : vector<1x256xf32> to vector<4x256xf32>
    %25 = arith.mulf %22, %24 : vector<4x256xf32>
    %c0_20 = arith.constant 0 : index
    %c113 = arith.constant 113 : index
    %26 = vector.load %arg10[%c0_20, %c113] : memref<4x512xf32, #tpu.memory_space<vmem>>, vector<4x256xf32>
    %27 = vector.extract_strided_slice %2 {offsets = [2, 0], sizes = [1, 256], strides = [1, 1]} : vector<9x256xf32> to vector<1x256xf32>
    %28 = vector.broadcast %27 : vector<1x256xf32> to vector<4x256xf32>
    %29 = arith.mulf %26, %28 : vector<4x256xf32>
    %c0_21 = arith.constant 0 : index
    %c127 = arith.constant 127 : index
    %30 = vector.load %arg10[%c0_21, %c127] : memref<4x512xf32, #tpu.memory_space<vmem>>, vector<4x256xf32>
    %31 = vector.extract_strided_slice %2 {offsets = [3, 0], sizes = [1, 256], strides = [1, 1]} : vector<9x256xf32> to vector<1x256xf32>
    %32 = vector.broadcast %31 : vector<1x256xf32> to vector<4x256xf32>
    %33 = arith.mulf %30, %32 : vector<4x256xf32>
    %c0_22 = arith.constant 0 : index
    %c129 = arith.constant 129 : index
    %34 = vector.load %arg10[%c0_22, %c129] : memref<4x512xf32, #tpu.memory_space<vmem>>, vector<4x256xf32>
    %35 = vector.extract_strided_slice %2 {offsets = [5, 0], sizes = [1, 256], strides = [1, 1]} : vector<9x256xf32> to vector<1x256xf32>
    %36 = vector.broadcast %35 : vector<1x256xf32> to vector<4x256xf32>
    %37 = arith.mulf %34, %36 : vector<4x256xf32>
    %c0_23 = arith.constant 0 : index
    %c143 = arith.constant 143 : index
    %38 = vector.load %arg10[%c0_23, %c143] : memref<4x512xf32, #tpu.memory_space<vmem>>, vector<4x256xf32>
    %39 = vector.extract_strided_slice %2 {offsets = [6, 0], sizes = [1, 256], strides = [1, 1]} : vector<9x256xf32> to vector<1x256xf32>
    %40 = vector.broadcast %39 : vector<1x256xf32> to vector<4x256xf32>
    %41 = arith.mulf %38, %40 : vector<4x256xf32>
    %c0_24 = arith.constant 0 : index
    %c144 = arith.constant 144 : index
    %42 = vector.load %arg10[%c0_24, %c144] : memref<4x512xf32, #tpu.memory_space<vmem>>, vector<4x256xf32>
    %43 = vector.extract_strided_slice %2 {offsets = [7, 0], sizes = [1, 256], strides = [1, 1]} : vector<9x256xf32> to vector<1x256xf32>
    %44 = vector.broadcast %43 : vector<1x256xf32> to vector<4x256xf32>
    %45 = arith.mulf %42, %44 : vector<4x256xf32>
    %c0_25 = arith.constant 0 : index
    %c145 = arith.constant 145 : index
    %46 = vector.load %arg10[%c0_25, %c145] : memref<4x512xf32, #tpu.memory_space<vmem>>, vector<4x256xf32>
    %47 = vector.extract_strided_slice %2 {offsets = [8, 0], sizes = [1, 256], strides = [1, 1]} : vector<9x256xf32> to vector<1x256xf32>
    %48 = vector.broadcast %47 : vector<1x256xf32> to vector<4x256xf32>
    %49 = arith.mulf %46, %48 : vector<4x256xf32>
    %50 = tpu.concatenate %21, %25, %29, %33, %16, %37, %41, %45, %49 in 0 : vector<4x256xf32>, vector<4x256xf32>, vector<4x256xf32>, vector<4x256xf32>, vector<4x256xf32>, vector<4x256xf32>, vector<4x256xf32>, vector<4x256xf32>, vector<4x256xf32> -> vector<36x256xf32>
    %c0_26 = arith.constant 0 : index
    %c0_27 = arith.constant 0 : index
    %51 = vector.load %arg4[%c0_26, %c0_27] : memref<8x36xf32, #tpu.memory_space<vmem>>, vector<8x36xf32>
    %cst_28 = arith.constant dense<0.000000e+00> : vector<8x256xf32>
    %52 = tpu.matmul %51, %50, %cst_28 {dimension_numbers = #tpu.dot_dimension_numbers<[1], [0], [0], [1], [0, 0, 1, 1], [], []>} : vector<8x36xf32>, vector<36x256xf32>, vector<8x256xf32> -> vector<8x256xf32>
    %c0_29 = arith.constant 0 : index
    %c0_30 = arith.constant 0 : index
    %53 = vector.load %arg5[%c0_29, %c0_30] : memref<8x1xf32, #tpu.memory_space<vmem>>, vector<8x1xf32>
    %54 = vector.broadcast %53 : vector<8x1xf32> to vector<8x256xf32>
    %55 = arith.addf %52, %54 : vector<8x256xf32>
    %cst_31 = arith.constant 0.000000e+00 : f32
    %56 = vector.broadcast %cst_31 : f32 to vector<8x256xf32>
    %57 = arith.maximumf %55, %56 : vector<8x256xf32>
    %c0_32 = arith.constant 0 : index
    %c128_33 = arith.constant 128 : index
    %58 = vector.load %arg11[%c0_32, %c128_33] : memref<8x512xf32, #tpu.memory_space<vmem>>, vector<8x256xf32>
    tpu.vector_store %arg11[%c0_32, %c128_33], %57 {strides = array<i32>} : memref<8x512xf32, #tpu.memory_space<vmem>>, vector<8x256xf32>,
    %c0_34 = arith.constant 0 : index
    %c111_35 = arith.constant 111 : index
    %59 = vector.load %arg11[%c0_34, %c111_35] : memref<8x512xf32, #tpu.memory_space<vmem>>, vector<8x256xf32>
    %60 = vector.extract_strided_slice %2 {offsets = [0, 0], sizes = [1, 256], strides = [1, 1]} : vector<9x256xf32> to vector<1x256xf32>
    %61 = vector.broadcast %60 : vector<1x256xf32> to vector<8x256xf32>
    %62 = arith.mulf %59, %61 : vector<8x256xf32>
    %c0_36 = arith.constant 0 : index
    %c112_37 = arith.constant 112 : index
    %63 = vector.load %arg11[%c0_36, %c112_37] : memref<8x512xf32, #tpu.memory_space<vmem>>, vector<8x256xf32>
    %64 = vector.extract_strided_slice %2 {offsets = [1, 0], sizes = [1, 256], strides = [1, 1]} : vector<9x256xf32> to vector<1x256xf32>
    %65 = vector.broadcast %64 : vector<1x256xf32> to vector<8x256xf32>
    %66 = arith.mulf %63, %65 : vector<8x256xf32>
    %c0_38 = arith.constant 0 : index
    %c113_39 = arith.constant 113 : index
    %67 = vector.load %arg11[%c0_38, %c113_39] : memref<8x512xf32, #tpu.memory_space<vmem>>, vector<8x256xf32>
    %68 = vector.extract_strided_slice %2 {offsets = [2, 0], sizes = [1, 256], strides = [1, 1]} : vector<9x256xf32> to vector<1x256xf32>
    %69 = vector.broadcast %68 : vector<1x256xf32> to vector<8x256xf32>
    %70 = arith.mulf %67, %69 : vector<8x256xf32>
    %c0_40 = arith.constant 0 : index
    %c127_41 = arith.constant 127 : index
    %71 = vector.load %arg11[%c0_40, %c127_41] : memref<8x512xf32, #tpu.memory_space<vmem>>, vector<8x256xf32>
    %72 = vector.extract_strided_slice %2 {offsets = [3, 0], sizes = [1, 256], strides = [1, 1]} : vector<9x256xf32> to vector<1x256xf32>
    %73 = vector.broadcast %72 : vector<1x256xf32> to vector<8x256xf32>
    %74 = arith.mulf %71, %73 : vector<8x256xf32>
    %c0_42 = arith.constant 0 : index
    %c129_43 = arith.constant 129 : index
    %75 = vector.load %arg11[%c0_42, %c129_43] : memref<8x512xf32, #tpu.memory_space<vmem>>, vector<8x256xf32>
    %76 = vector.extract_strided_slice %2 {offsets = [5, 0], sizes = [1, 256], strides = [1, 1]} : vector<9x256xf32> to vector<1x256xf32>
    %77 = vector.broadcast %76 : vector<1x256xf32> to vector<8x256xf32>
    %78 = arith.mulf %75, %77 : vector<8x256xf32>
    %c0_44 = arith.constant 0 : index
    %c143_45 = arith.constant 143 : index
    %79 = vector.load %arg11[%c0_44, %c143_45] : memref<8x512xf32, #tpu.memory_space<vmem>>, vector<8x256xf32>
    %80 = vector.extract_strided_slice %2 {offsets = [6, 0], sizes = [1, 256], strides = [1, 1]} : vector<9x256xf32> to vector<1x256xf32>
    %81 = vector.broadcast %80 : vector<1x256xf32> to vector<8x256xf32>
    %82 = arith.mulf %79, %81 : vector<8x256xf32>
    %c0_46 = arith.constant 0 : index
    %c144_47 = arith.constant 144 : index
    %83 = vector.load %arg11[%c0_46, %c144_47] : memref<8x512xf32, #tpu.memory_space<vmem>>, vector<8x256xf32>
    %84 = vector.extract_strided_slice %2 {offsets = [7, 0], sizes = [1, 256], strides = [1, 1]} : vector<9x256xf32> to vector<1x256xf32>
    %85 = vector.broadcast %84 : vector<1x256xf32> to vector<8x256xf32>
    %86 = arith.mulf %83, %85 : vector<8x256xf32>
    %c0_48 = arith.constant 0 : index
    %c145_49 = arith.constant 145 : index
    %87 = vector.load %arg11[%c0_48, %c145_49] : memref<8x512xf32, #tpu.memory_space<vmem>>, vector<8x256xf32>
    %88 = vector.extract_strided_slice %2 {offsets = [8, 0], sizes = [1, 256], strides = [1, 1]} : vector<9x256xf32> to vector<1x256xf32>
    %89 = vector.broadcast %88 : vector<1x256xf32> to vector<8x256xf32>
    %90 = arith.mulf %87, %89 : vector<8x256xf32>
    %91 = tpu.concatenate %62, %66, %70, %74, %57, %78, %82, %86, %90, %1 in 0 : vector<8x256xf32>, vector<8x256xf32>, vector<8x256xf32>, vector<8x256xf32>, vector<8x256xf32>, vector<8x256xf32>, vector<8x256xf32>, vector<8x256xf32>, vector<8x256xf32>, vector<4x256xf32> -> vector<76x256xf32>
    %c0_50 = arith.constant 0 : index
    %c0_51 = arith.constant 0 : index
    %92 = vector.load %arg6[%c0_50, %c0_51] : memref<8x76xf32, #tpu.memory_space<vmem>>, vector<8x76xf32>
    %cst_52 = arith.constant dense<0.000000e+00> : vector<8x256xf32>
    %93 = tpu.matmul %92, %91, %cst_52 {dimension_numbers = #tpu.dot_dimension_numbers<[1], [0], [0], [1], [0, 0, 1, 1], [], []>} : vector<8x76xf32>, vector<76x256xf32>, vector<8x256xf32> -> vector<8x256xf32>
    %c0_53 = arith.constant 0 : index
    %c0_54 = arith.constant 0 : index
    %94 = vector.load %arg8[%c0_53, %c0_54] : memref<8x1xf32, #tpu.memory_space<vmem>>, vector<8x1xf32>
    %95 = vector.broadcast %94 : vector<8x1xf32> to vector<8x256xf32>
    %96 = arith.addf %93, %95 : vector<8x256xf32>
    %c0_55 = arith.constant 0 : index
    %c0_56 = arith.constant 0 : index
    %c0_57 = arith.constant 0 : index
    %97 = vector.load %arg9[%c0_55, %c0_56, %c0_57] : memref<1x8x256xf32, #tpu.memory_space<vmem>>, vector<1x8x256xf32>
    %98 = vector.shape_cast %97 : vector<1x8x256xf32> to vector<8x256xf32>
    %99 = vector.shape_cast %96 : vector<8x256xf32> to vector<1x8x256xf32>
    tpu.vector_store %arg9[%c0_55, %c0_56, %c0_57], %99 {strides = array<i32>} : memref<1x8x256xf32, #tpu.memory_space<vmem>>, vector<1x8x256xf32>,
    return
  }
  func.func @transform_0(%arg0: i32) -> (i32, i32, i32) {
    %c0_i32 = arith.constant 0 : i32
    %c0_i32_0 = arith.constant 0 : i32
    %c0_i32_1 = arith.constant 0 : i32
    return %arg0, %c0_i32, %c0_i32_0 : i32, i32, i32
  }
  func.func @transform_1(%arg0: i32) -> (i32, i32) {
    %c0_i32 = arith.constant 0 : i32
    %c0_i32_0 = arith.constant 0 : i32
    %c0_i32_1 = arith.constant 0 : i32
    return %c0_i32, %c0_i32_0 : i32, i32
  }
  func.func @transform_2(%arg0: i32) -> (i32, i32) {
    %c0_i32 = arith.constant 0 : i32
    %c0_i32_0 = arith.constant 0 : i32
    %c0_i32_1 = arith.constant 0 : i32
    return %c0_i32, %c0_i32_0 : i32, i32
  }
  func.func @transform_3(%arg0: i32) -> (i32, i32) {
    %c0_i32 = arith.constant 0 : i32
    %c0_i32_0 = arith.constant 0 : i32
    %c0_i32_1 = arith.constant 0 : i32
    return %c0_i32, %c0_i32_0 : i32, i32
  }
  func.func @transform_4(%arg0: i32) -> (i32, i32) {
    %c0_i32 = arith.constant 0 : i32
    %c0_i32_0 = arith.constant 0 : i32
    %c0_i32_1 = arith.constant 0 : i32
    return %c0_i32, %c0_i32_0 : i32, i32
  }
  func.func @transform_5(%arg0: i32) -> (i32, i32) {
    %c0_i32 = arith.constant 0 : i32
    %c0_i32_0 = arith.constant 0 : i32
    %c0_i32_1 = arith.constant 0 : i32
    return %c0_i32, %c0_i32_0 : i32, i32
  }
  func.func @transform_6(%arg0: i32) -> (i32, i32) {
    %c0_i32 = arith.constant 0 : i32
    %c0_i32_0 = arith.constant 0 : i32
    %c0_i32_1 = arith.constant 0 : i32
    return %c0_i32, %c0_i32_0 : i32, i32
  }
  func.func @transform_7(%arg0: i32) -> (i32, i32) {
    %c0_i32 = arith.constant 0 : i32
    %c0_i32_0 = arith.constant 0 : i32
    %c0_i32_1 = arith.constant 0 : i32
    return %c0_i32, %c0_i32_0 : i32, i32
  }
  func.func @transform_8(%arg0: i32) -> (i32, i32, i32) {
    %c0_i32 = arith.constant 0 : i32
    %c0_i32_0 = arith.constant 0 : i32
    %c0_i32_1 = arith.constant 0 : i32
    return %arg0, %c0_i32, %c0_i32_0 : i32, i32, i32
  }
}

</mosaic_0001>

<llo_original>
// kernel: tpu_custom_call.1
$region0: #{tpu_custom_call.1}
  #allocation0 [shape = 'u32[]', space=smem, size = 0x4, offset = 0x4, fixed_abs, tag = 'smem constant byte address 0x4 - core index']
  #allocation1 [shape = 'u32[72,128]{1,0:T(1,128)}', space=vmem, size = 0x9000, scoped, tag = 'internal scratch']
  #allocation2 [shape = 'f32[4,512]{1,0:T(4,128)}', space=vmem, size = 0x2000, scoped, tag = 'scratch operand']
  #allocation3 [shape = 'f32[8,512]{1,0:T(8,128)}', space=vmem, size = 0x4000, scoped, tag = 'scratch operand']
  %s0 = inlined_call_operand.hbm [shape: f32[2,4,256], index: 0, kind: input, shape index: {}]
  %s1 = inlined_call_operand.vmem [shape: f32[4,1], index: 1, kind: input, shape index: {}]
  %s2 = inlined_call_operand.vmem [shape: f32[4,1], index: 2, kind: input, shape index: {}]
  %s3 = inlined_call_operand.hbm [shape: f32[8,36], index: 3, kind: input, shape index: {}]
  %s4 = inlined_call_operand.vmem [shape: f32[8,1], index: 4, kind: input, shape index: {}]
  %s5 = inlined_call_operand.hbm [shape: f32[8,76], index: 5, kind: input, shape index: {}]
  %s6 = inlined_call_operand.vmem [shape: f32[9,256], index: 6, kind: input, shape index: {}]
  %s7 = inlined_call_operand.vmem [shape: f32[8,1], index: 7, kind: input, shape index: {}]
  %s8 = inlined_call_operand.hbm [shape: f32[2,8,256], index: 8, kind: output, shape index: {}]
  %s9 = sld [smem:[#allocation0]]
  $region77: #{tpu_custom_call.1} parent=0
    _
  %s11 = ssub.s32 1, %s9
  %s12 = scalar_select 0, %s11, %s9
  $region1: #{tpu_custom_call.1} parent=0
    #allocation4 [shape = 'u8[8192]{0}', space=vmem, size = 0x2000, scoped, tag = 'input window, operand 0']
    #allocation5 [shape = 's32[2]{0}', space=sflag, size = 0x8, scoped, tag = 'scoped memory for tpu_custom_call.1']
    #allocation6 [shape = 's32[2]{0}', space=sflag, size = 0x8, scoped, tag = 'scoped memory for tpu_custom_call.1']
    #allocation7 [shape = 'u8[4096]{0}', space=vmem, size = 0x1000, scoped, tag = 'input window, operand 3, single buffered']
    #allocation8 [shape = 's32[1]{0}', space=sflag, size = 0x4, scoped, tag = 'scoped memory for tpu_custom_call.1']
    #allocation9 [shape = 'u8[4096]{0}', space=vmem, size = 0x1000, scoped, tag = 'input window, operand 5, single buffered']
    #allocation10 [shape = 'u8[16384]{0}', space=vmem, size = 0x4000, scoped, tag = 'output window, operand 0']
    %13 = vsyncpa [#allocation5], 0
    %s14 = scalar_lea.sflag [#allocation5], 1
    %15 = vsyncpa %s14, 0
    %16 = vsyncpa [#allocation8], 0
    %17 = vsyncpa [#allocation6], 0
    %s18 = scalar_lea.sflag [#allocation6], 1
    %19 = vsyncpa %s18, 0
    loop: start=0, step=1, limit=4
    $region2: #{tpu_custom_call.1} parent=1 // loop_pre_header
      _
    $region3: #{tpu_custom_call.1} parent=1 // loop_header
      %s21 = sphi 0, %s25
      %p22 = scmp.ge.s32.totalorder %s21, 4
      %s31 = sphi 0, %s33
      %s34 = sphi 0, %s31
      %s35 = sphi 0, %s34
      %s51 = sphi 0, %s35
      %s55 = sphi 0, %s55
      %s57 = sphi 0, %s55
      %s58 = sphi 0, %s57
      %s72 = sphi 0, %s58
      %s76 = sphi 0, %s76
      %s78 = sphi 0, %s76
      %s79 = sphi 0, %s78
      %s93 = sphi 0, %s79
      %s97 = sphi 0, %s97
      %s99 = sphi 0, %s97
      %s100 = sphi 0, %s99
      %s114 = sphi 0, %s100
      %s118 = sphi 0, %s118
      %s120 = sphi 0, %s118
      %s121 = sphi 0, %s120
      %s135 = sphi 0, %s121
      %s139 = sphi 0, %s139
      %s141 = sphi 0, %s139
      %s142 = sphi 0, %s141
      %s156 = sphi 0, %s142
      %s160 = sphi 0, %s160
      %s162 = sphi 0, %s160
      %s163 = sphi 0, %s162
      %s177 = sphi 0, %s163
      %s181 = sphi 0, %s181
      %s183 = sphi 0, %s181
      %s184 = sphi 0, %s183
      %s198 = sphi 0, %s184
      %s204 = sphi 0, %s206
      %s207 = sphi 0, %s204
      %s208 = sphi 0, %s207
      %s224 = sphi 0, %s208
    $region4: #{tpu_custom_call.1} parent=1 // loop_header_branch
      %24 = sbr.rel (%p22) target = $region8
    $region5: #{tpu_custom_call.1} parent=1 // loop_body
      %s26 = ssub.s32 %s21, 1
      %s27 = ssub.s32 %s21, 2
      %s28 = sadd.s32 %s21, 1
      %s29 = ssub.s32 %s21, %s28
      %p30 = scmp.eq.s32.totalorder %s29, 0
      %s32 = sadd.s32 %s31, 1
      %s33 = scalar_select %p30, %s31, %s32
      %p36 = pneg %p30
      %p37 = scmp.eq.s32.totalorder %s21, 1
      %p38 = por %p36, %p37
      %p39 = scmp.ne.s32.totalorder %s31, %s34
      %p40 = scmp.eq.s32.totalorder %s21, 0
      %p41 = por %p39, %p40
      %p42 = scmp.ne.s32.totalorder %s31, %s34
      %p43 = scmp.eq.s32.totalorder %s26, 1
      %p44 = por %p42, %p43
      %p45 = scmp.ne.s32.totalorder %s34, %s35
      %p46 = scmp.eq.s32.totalorder %s26, 0
      %p47 = por %p45, %p46
      %p48 = scmp.ne.s32.totalorder %s34, %s35
      %p49 = scmp.eq.s32.totalorder %s27, 1
      %p50 = por %p48, %p49
      %p52 = scmp.ne.s32.totalorder %s35, %s51
      %p53 = scmp.eq.s32.totalorder %s27, 0
      %p54 = por %p52, %p53
      %s56 = sadd.s32 %s55, 1
      %p59 = scmp.eq.s32.totalorder %s21, 1
      %p60 = scmp.ne.s32.totalorder %s55, %s57
      %p61 = scmp.eq.s32.totalorder %s21, 0
      %p62 = por %p60, %p61
      %p63 = scmp.ne.s32.totalorder %s55, %s57
      %p64 = scmp.eq.s32.totalorder %s26, 1
      %p65 = por %p63, %p64
      %p66 = scmp.ne.s32.totalorder %s57, %s58
      %p67 = scmp.eq.s32.totalorder %s26, 0
      %p68 = por %p66, %p67
      %p69 = scmp.ne.s32.totalorder %s57, %s58
      %p70 = scmp.eq.s32.totalorder %s27, 1
      %p71 = por %p69, %p70
      %p73 = scmp.ne.s32.totalorder %s58, %s72
      %p74 = scmp.eq.s32.totalorder %s27, 0
      %p75 = por %p73, %p74
      %s77 = sadd.s32 %s76, 1
      %p80 = scmp.eq.s32.totalorder %s21, 1
      %p81 = scmp.ne.s32.totalorder %s76, %s78
      %p82 = scmp.eq.s32.totalorder %s21, 0
      %p83 = por %p81, %p82
      %p84 = scmp.ne.s32.totalorder %s76, %s78
      %p85 = scmp.eq.s32.totalorder %s26, 1
      %p86 = por %p84, %p85
      %p87 = scmp.ne.s32.totalorder %s78, %s79
      %p88 = scmp.eq.s32.totalorder %s26, 0
      %p89 = por %p87, %p88
      %p90 = scmp.ne.s32.totalorder %s78, %s79
      %p91 = scmp.eq.s32.totalorder %s27, 1
      %p92 = por %p90, %p91
      %p94 = scmp.ne.s32.totalorder %s79, %s93
      %p95 = scmp.eq.s32.totalorder %s27, 0
      %p96 = por %p94, %p95
      %s98 = sadd.s32 %s97, 1
      %p101 = scmp.eq.s32.totalorder %s21, 1
      %p102 = scmp.ne.s32.totalorder %s97, %s99
      %p103 = scmp.eq.s32.totalorder %s21, 0
      %p104 = por %p102, %p103
      %p105 = scmp.ne.s32.totalorder %s97, %s99
      %p106 = scmp.eq.s32.totalorder %s26, 1
      %p107 = por %p105, %p106
      %p108 = scmp.ne.s32.totalorder %s99, %s100
      %p109 = scmp.eq.s32.totalorder %s26, 0
      %p110 = por %p108, %p109
      %p111 = scmp.ne.s32.totalorder %s99, %s100
      %p112 = scmp.eq.s32.totalorder %s27, 1
      %p113 = por %p111, %p112
      %p115 = scmp.ne.s32.totalorder %s100, %s114
      %p116 = scmp.eq.s32.totalorder %s27, 0
      %p117 = por %p115, %p116
      %s119 = sadd.s32 %s118, 1
      %p122 = scmp.eq.s32.totalorder %s21, 1
      %p123 = scmp.ne.s32.totalorder %s118, %s120
      %p124 = scmp.eq.s32.totalorder %s21, 0
      %p125 = por %p123, %p124
      %p126 = scmp.ne.s32.totalorder %s118, %s120
      %p127 = scmp.eq.s32.totalorder %s26, 1
      %p128 = por %p126, %p127
      %p129 = scmp.ne.s32.totalorder %s120, %s121
      %p130 = scmp.eq.s32.totalorder %s26, 0
      %p131 = por %p129, %p130
      %p132 = scmp.ne.s32.totalorder %s120, %s121
      %p133 = scmp.eq.s32.totalorder %s27, 1
      %p134 = por %p132, %p133
      %p136 = scmp.ne.s32.totalorder %s121, %s135
      %p137 = scmp.eq.s32.totalorder %s27, 0
      %p138 = por %p136, %p137
      %s140 = sadd.s32 %s139, 1
      %p143 = scmp.eq.s32.totalorder %s21, 1
      %p144 = scmp.ne.s32.totalorder %s139, %s141
      %p145 = scmp.eq.s32.totalorder %s21, 0
      %p146 = por %p144, %p145
      %p147 = scmp.ne.s32.totalorder %s139, %s141
      %p148 = scmp.eq.s32.totalorder %s26, 1
      %p149 = por %p147, %p148
      %p150 = scmp.ne.s32.totalorder %s141, %s142
      %p151 = scmp.eq.s32.totalorder %s26, 0
      %p152 = por %p150, %p151
      %p153 = scmp.ne.s32.totalorder %s141, %s142
      %p154 = scmp.eq.s32.totalorder %s27, 1
      %p155 = por %p153, %p154
      %p157 = scmp.ne.s32.totalorder %s142, %s156
      %p158 = scmp.eq.s32.totalorder %s27, 0
      %p159 = por %p157, %p158
      %s161 = sadd.s32 %s160, 1
      %p164 = scmp.eq.s32.totalorder %s21, 1
      %p165 = scmp.ne.s32.totalorder %s160, %s162
      %p166 = scmp.eq.s32.totalorder %s21, 0
      %p167 = por %p165, %p166
      %p168 = scmp.ne.s32.totalorder %s160, %s162
      %p169 = scmp.eq.s32.totalorder %s26, 1
      %p170 = por %p168, %p169
      %p171 = scmp.ne.s32.totalorder %s162, %s163
      %p172 = scmp.eq.s32.totalorder %s26, 0
      %p173 = por %p171, %p172
      %p174 = scmp.ne.s32.totalorder %s162, %s163
      %p175 = scmp.eq.s32.totalorder %s27, 1
      %p176 = por %p174, %p175
      %p178 = scmp.ne.s32.totalorder %s163, %s177
      %p179 = scmp.eq.s32.totalorder %s27, 0
      %p180 = por %p178, %p179
      %s182 = sadd.s32 %s181, 1
      %p185 = scmp.eq.s32.totalorder %s21, 1
      %p186 = scmp.ne.s32.totalorder %s181, %s183
      %p187 = scmp.eq.s32.totalorder %s21, 0
      %p188 = por %p186, %p187
      %p189 = scmp.ne.s32.totalorder %s181, %s183
      %p190 = scmp.eq.s32.totalorder %s26, 1
      %p191 = por %p189, %p190
      %p192 = scmp.ne.s32.totalorder %s183, %s184
      %p193 = scmp.eq.s32.totalorder %s26, 0
      %p194 = por %p192, %p193
      %p195 = scmp.ne.s32.totalorder %s183, %s184
      %p196 = scmp.eq.s32.totalorder %s27, 1
      %p197 = por %p195, %p196
      %p199 = scmp.ne.s32.totalorder %s184, %s198
      %p200 = scmp.eq.s32.totalorder %s27, 0
      %p201 = por %p199, %p200
      %s202 = ssub.s32 %s21, %s28
      %p203 = scmp.eq.s32.totalorder %s202, 0
      %s205 = sadd.s32 %s204, 1
      %s206 = scalar_select %p203, %s204, %s205
      %p209 = pneg %p203
      %p210 = scmp.eq.s32.totalorder %s21, 1
      %p211 = por %p209, %p210
      %p212 = scmp.ne.s32.totalorder %s204, %s207
      %p213 = scmp.eq.s32.totalorder %s21, 0
      %p214 = por %p212, %p213
      %p215 = scmp.ne.s32.totalorder %s204, %s207
      %p216 = scmp.eq.s32.totalorder %s26, 1
      %p217 = por %p215, %p216
      %p218 = scmp.ne.s32.totalorder %s207, %s208
      %p219 = scmp.eq.s32.totalorder %s26, 0
      %p220 = por %p218, %p219
      %p221 = scmp.ne.s32.totalorder %s207, %s208
      %p222 = scmp.eq.s32.totalorder %s27, 1
      %p223 = por %p221, %p222
      %p225 = scmp.ne.s32.totalorder %s208, %s224
      %p226 = scmp.eq.s32.totalorder %s27, 0
      %p227 = por %p225, %p226
      %p228 = scmp.le.s32.totalorder 1, %s21
      %p229 = scmp.lt.s32.totalorder %s21, 3
      %p230 = pnand %p228, %p229
      %p231 = pneg %p230
      // Predicated region
      $region9: #{tpu_custom_call.1} parent=5 // pred_check
        _
      $region10: #{tpu_custom_call.1} parent=5 // pred_check_branch
        %233 = sbr.rel (%p230) target = $region12
      $region11: #{tpu_custom_call.1} parent=5 // pred_region
        %s234 = ssub.s32 %s21, 1
        // Predicated region
        $region13: #{tpu_custom_call.1} parent=11 // pred_check
          %p235 = pneg %p68
        $region14: #{tpu_custom_call.1} parent=11 // pred_check_branch
          %237 = sbr.rel (%p235) target = $region16
        $region15: #{tpu_custom_call.1} parent=11 // pred_region
          _
        $region16: #{tpu_custom_call.1} parent=11 // pred_fallthru
          _
        // Predicated region
        $region17: #{tpu_custom_call.1} parent=11 // pred_check
          %p238 = pneg %p89
        $region18: #{tpu_custom_call.1} parent=11 // pred_check_branch
          %240 = sbr.rel (%p238) target = $region20
        $region19: #{tpu_custom_call.1} parent=11 // pred_region
          _
        $region20: #{tpu_custom_call.1} parent=11 // pred_fallthru
          _
        // Predicated region
        $region21: #{tpu_custom_call.1} parent=11 // pred_check
          %p241 = pneg %p110
        $region22: #{tpu_custom_call.1} parent=11 // pred_check_branch
          %243 = sbr.rel (%p241) target = $region24
        $region23: #{tpu_custom_call.1} parent=11 // pred_region
          %245 = vsyncadd [#allocation8], 0
          %s247 = sshll.u32 %s3, 4
          %s248 = int_to_ptr.hbm [resolvable:$true] %s247
          %s249 = sshll.u32 [#allocation7], 4
          %s250 = int_to_ptr.vmem [resolvable:$true] %s249
          %252 = dma.hbm_to_vmem [thread:$0]  %s248, 128, %s250, [#allocation8]
        $region24: #{tpu_custom_call.1} parent=11 // pred_fallthru
          _
        // Predicated region
        $region25: #{tpu_custom_call.1} parent=11 // pred_check
          %p253 = pneg %p131
        $region26: #{tpu_custom_call.1} parent=11 // pred_check_branch
          %255 = sbr.rel (%p253) target = $region28
        $region27: #{tpu_custom_call.1} parent=11 // pred_region
          _
        $region28: #{tpu_custom_call.1} parent=11 // pred_fallthru
          _
        // Predicated region
        $region29: #{tpu_custom_call.1} parent=11 // pred_check
          %p256 = pneg %p152
        $region30: #{tpu_custom_call.1} parent=11 // pred_check_branch
          %258 = sbr.rel (%p256) target = $region32
        $region31: #{tpu_custom_call.1} parent=11 // pred_region
          %260 = vsyncadd [#allocation8], 0
          %s262 = sshll.u32 %s5, 4
          %s263 = int_to_ptr.hbm [resolvable:$true] %s262
          %s264 = sshll.u32 [#allocation9], 4
          %s265 = int_to_ptr.vmem [resolvable:$true] %s264
          %267 = dma.hbm_to_vmem [thread:$0]  %s263, 128, %s265, [#allocation8]
        $region32: #{tpu_custom_call.1} parent=11 // pred_fallthru
          _
        // Predicated region
        $region33: #{tpu_custom_call.1} parent=11 // pred_check
          %p268 = pneg %p173
        $region34: #{tpu_custom_call.1} parent=11 // pred_check_branch
          %270 = sbr.rel (%p268) target = $region36
        $region35: #{tpu_custom_call.1} parent=11 // pred_region
          _
        $region36: #{tpu_custom_call.1} parent=11 // pred_fallthru
          _
        // Predicated region
        $region37: #{tpu_custom_call.1} parent=11 // pred_check
          %p271 = pneg %p194
        $region38: #{tpu_custom_call.1} parent=11 // pred_check_branch
          %273 = sbr.rel (%p271) target = $region40
        $region39: #{tpu_custom_call.1} parent=11 // pred_region
          _
        $region40: #{tpu_custom_call.1} parent=11 // pred_fallthru
          _
      $region12: #{tpu_custom_call.1} parent=5 // pred_fallthru
        _
      %p274 = scmp.lt.s32.totalorder %s21, 2
      // Predicated region
      $region41: #{tpu_custom_call.1} parent=5 // pred_check
        %p275 = pneg %p274
      $region42: #{tpu_custom_call.1} parent=5 // pred_check_branch
        %277 = sbr.rel (%p275) target = $region44
      $region43: #{tpu_custom_call.1} parent=5 // pred_region
        // Predicated region
        $region45: #{tpu_custom_call.1} parent=43 // pred_check
          %p278 = pneg %p41
        $region46: #{tpu_custom_call.1} parent=43 // pred_check_branch
          %280 = sbr.rel (%p278) target = $region48
        $region47: #{tpu_custom_call.1} parent=43 // pred_region
          %s281 = sand.u32 %s31, 1
          %s282 = scalar_lea.sflag [#allocation5], %s281
          %s283 = sand.u32 %s31, 1
          %s284 = smul.addr %s283, 8
          %s285 = scalar_lea.vmem [#allocation4], %s284
          %287 = vsyncadd %s282, 0
          %s288 = smul.addr %s21, 2
          %s289 = smul.addr %s288, 4
          %s290 = scalar_lea.hbm %s0, %s289
          %s292 = sshll.u32 %s290, 4
          %s293 = int_to_ptr.hbm [resolvable:$true] %s292
          %s294 = sshll.u32 %s285, 4
          %s295 = int_to_ptr.vmem [resolvable:$true] %s294
          %297 = dma.hbm_to_vmem [thread:$0]  %s293, 128, %s295, %s282
        $region48: #{tpu_custom_call.1} parent=43 // pred_fallthru
          _
      $region44: #{tpu_custom_call.1} parent=5 // pred_fallthru
        _
      %p298 = scmp.le.s32.totalorder 1, %s21
      %p299 = scmp.lt.s32.totalorder %s21, 3
      %p300 = pnand %p298, %p299
      %p301 = pneg %p300
      // Predicated region
      $region49: #{tpu_custom_call.1} parent=5 // pred_check
        _
      $region50: #{tpu_custom_call.1} parent=5 // pred_check_branch
        %303 = sbr.rel (%p300) target = $region52
      $region51: #{tpu_custom_call.1} parent=5 // pred_region
        %s304 = ssub.s32 %s21, 1
        %s305 = sand.u32 %s34, 1
        %s306 = scalar_lea.sflag [#allocation5], %s305
        %s307 = sand.u32 %s34, 1
        %s308 = smul.addr %s307, 8
        %s309 = scalar_lea.vmem [#allocation4], %s308
        // Predicated region
        $region53: #{tpu_custom_call.1} parent=51 // pred_check
          %p310 = pneg %p47
        $region54: #{tpu_custom_call.1} parent=51 // pred_check_branch
          %312 = sbr.rel (%p310) target = $region56
        $region55: #{tpu_custom_call.1} parent=51 // pred_region
          %314 = dma.done %s306, 128
        $region56: #{tpu_custom_call.1} parent=51 // pred_fallthru
          _
        // Predicated region
        $region57: #{tpu_custom_call.1} parent=51 // pred_check
          %p315 = pneg %p110
        $region58: #{tpu_custom_call.1} parent=51 // pred_check_branch
          %317 = sbr.rel (%p315) target = $region60
        $region59: #{tpu_custom_call.1} parent=51 // pred_region
          %319 = dma.done [#allocation8], 128
        $region60: #{tpu_custom_call.1} parent=51 // pred_fallthru
          _
        // Predicated region
        $region61: #{tpu_custom_call.1} parent=51 // pred_check
          %p320 = pneg %p152
        $region62: #{tpu_custom_call.1} parent=51 // pred_check_branch
          %322 = sbr.rel (%p320) target = $region64
        $region63: #{tpu_custom_call.1} parent=51 // pred_region
          %324 = dma.done [#allocation8], 128
        $region64: #{tpu_custom_call.1} parent=51 // pred_fallthru
          _
        %s325 = sand.u32 %s34, 1
        %s326 = scalar_lea.sflag [#allocation5], %s325
        %s327 = sand.u32 %s34, 1
        %s328 = smul.addr %s327, 8
        %s329 = scalar_lea.vmem [#allocation4], %s328
        %p330 = pneg %p47
        %p331 = pneg %p44
        %p332 = pneg %p68
        %p333 = pneg %p65
        %p334 = pneg %p89
        %p335 = pneg %p86
        %p336 = pneg %p110
        %p337 = pneg %p107
        %p338 = pneg %p131
        %p339 = pneg %p128
        %p340 = pneg %p152
        %p341 = pneg %p149
        %p342 = pneg %p173
        %p343 = pneg %p170
        %p344 = pneg %p194
        %p345 = pneg %p191
        %p346 = pneg %p220
        %p347 = pneg %p217
        %s348 = sand.u32 %s207, 1
        %s349 = scalar_lea.sflag [#allocation6], %s348
        %s350 = sand.u32 %s207, 1
        %s351 = smul.addr %s350, 16
        %s352 = scalar_lea.vmem [#allocation10], %s351
        %v353 = vld [vmem:[%s309] sm:$0xff]
        %v354 = vld [vmem:[%s6] sm:$0xff]
        %v355 = vld [vmem:[%s6 + $0x8] sm:$0xff]
        %v356 = vld [vmem:[%s6 + $0x10] sm:$0x1]
        %v357 = vld [vmem:[%s6 + $0x18] sm:$0x1]
        %358 = vst [vmem:[#allocation2] sm:$0xf] 0.0
        %359 = vst [vmem:[#allocation2 + $0xc] sm:$0xf] 0.0
        %360 = vst [vmem:[#allocation3] sm:$0xff] 0.0
        %361 = vst [vmem:[#allocation3 + $0x18] sm:$0xff] 0.0
        %v362 = vld [vmem:[%s1] sm:$0xf]
        %364 = vset.pattern.permute.xlu0 0
        %365 = vperm.xlu0 %364, %v362
        %v366 = vpop.permute.xlu0 %365
        %v368 = vunpack.c.l.s4 839922192
        %v369 = vunpack.c.0.s8 %v368
        %v370 = vperm.slane %v366, %v369
        %v372 = vmul.f32 %v353, %v370
        %v373 = vld [vmem:[%s2] sm:$0xf]
        %375 = vset.pattern.permute.xlu0 0
        %376 = vperm.xlu0 %375, %v373
        %v377 = vpop.permute.xlu0 %376
        %v379 = vunpack.c.l.s4 839922192
        %v380 = vunpack.c.0.s8 %v379
        %v381 = vperm.slane %v377, %v380
        %v383 = vadd.f32 %v372, %v381
        %v384 = vmax.f32 %v383, 0.0
        %385 = vst [vmem:[#allocation2 + $0x4] sm:$0xff] %v384
        %v386 = vld [vmem:[#allocation2] sm:$0xff]
        %v387 = vld [vmem:[#allocation2 + $0x8] sm:$0xf]
        %v388 = vperm.slane %v354, 0
        %v389 = vperm.slane %v355, 0
        %v392 = vrot.slane %v389, 4
        %vm393 = vcmask 1043456
        %v394 = vsel %vm393, %v388, %v392
        %395 = vrot.lane.b32.xlu0 %v394, 111
        %v396 = vpop.permute.xlu0 %395
        %v397 = vrot.slane %v396, 4
        %vm398 = vcmask 908288
        %v399 = vsel %vm398, %v397, %v396
        %v402 = vmul.f32 %v386, %v399
        %v403 = vmul.f32 %v387, %v397
        %v404 = vperm.slane %v354, 1
        %v405 = vperm.slane %v355, 1
        %v408 = vrot.slane %v405, 4
        %v409 = vsel %vm393, %v404, %v408
        %410 = vrot.lane.b32.xlu0 %v409, 112
        %v411 = vpop.permute.xlu0 %410
        %v412 = vrot.slane %v411, 4
        %vm413 = vcmask 916480
        %v414 = vsel %vm413, %v412, %v411
        %v417 = vmul.f32 %v386, %v414
        %v418 = vmul.f32 %v387, %v412
        %v419 = vperm.slane %v354, 2
        %v420 = vperm.slane %v355, 2
        %v423 = vrot.slane %v420, 4
        %v424 = vsel %vm393, %v419, %v423
        %425 = vrot.lane.b32.xlu0 %v424, 113
        %v426 = vpop.permute.xlu0 %425
        %v427 = vrot.slane %v426, 4
        %vm428 = vcmask 924672
        %v429 = vsel %vm428, %v427, %v426
        %v432 = vmul.f32 %v386, %v429
        %v433 = vmul.f32 %v387, %v427
        %v434 = vperm.slane %v354, 3
        %v435 = vperm.slane %v355, 3
        %v438 = vrot.slane %v435, 4
        %v439 = vsel %vm393, %v434, %v438
        %440 = vrot.lane.b32.xlu0 %v439, 127
        %v441 = vpop.permute.xlu0 %440
        %v442 = vrot.slane %v441, 4
        %vm443 = vcmask 1039360
        %v444 = vsel %vm443, %v442, %v441
        %v447 = vmul.f32 %v386, %v444
        %v448 = vmul.f32 %v387, %v442
        %v449 = vld [vmem:[#allocation2 + $0x4] sm:$0xff]
        %v450 = vld [vmem:[#allocation2 + $0xc] sm:$0xf]
        %v451 = vperm.slane %v354, 5
        %v452 = vperm.slane %v355, 5
        %v455 = vrot.slane %v452, 4
        %v456 = vsel %vm393, %v451, %v455
        %457 = vrot.lane.b32.xlu0 %v456, 1
        %v458 = vpop.permute.xlu0 %457
        %v459 = vrot.slane %v458, 4
        %vm460 = vcmask 7168
        %v461 = vsel %vm460, %v459, %v458
        %v464 = vmul.f32 %v449, %v461
        %v465 = vmul.f32 %v450, %v459
        %v466 = vperm.slane %v354, 6
        %v467 = vperm.slane %v355, 6
        %v470 = vrot.slane %v467, 4
        %v471 = vsel %vm393, %v466, %v470
        %472 = vrot.lane.b32.xlu0 %v471, 15
        %v473 = vpop.permute.xlu0 %472
        %v474 = vrot.slane %v473, 4
        %vm475 = vcmask 121856
        %v476 = vsel %vm475, %v474, %v473
        %v479 = vmul.f32 %v449, %v476
        %v480 = vmul.f32 %v450, %v474
        %v481 = vperm.slane %v354, 7
        %v482 = vperm.slane %v355, 7
        %v485 = vrot.slane %v482, 4
        %v486 = vsel %vm393, %v481, %v485
        %487 = vrot.lane.b32.xlu0 %v486, 16
        %v488 = vpop.permute.xlu0 %487
        %v489 = vrot.slane %v488, 4
        %vm490 = vcmask 130048
        %v491 = vsel %vm490, %v489, %v488
        %v494 = vmul.f32 %v449, %v491
        %v495 = vmul.f32 %v450, %v489
        %v496 = vperm.slane %v356, 0
        %v497 = vperm.slane %v357, 0
        %v500 = vrot.slane %v497, 4
        %v501 = vsel %vm393, %v496, %v500
        %502 = vrot.lane.b32.xlu0 %v501, 17
        %v503 = vpop.permute.xlu0 %502
        %v504 = vrot.slane %v503, 4
        %vm505 = vcmask 138240
        %v506 = vsel %vm505, %v504, %v503
        %v509 = vmul.f32 %v449, %v506
        %v510 = vmul.f32 %v450, %v504
        %513 = vst [vmem:[#allocation1] ss:$2 sm:$0xff] %v402
        %s514 = scalar_lea.vmem [#allocation1], 16
        %515 = vst [vmem:[%s514] ss:$2 sm:$0xff] %v403
        %v516 = vld.sshfl [vmem:[#allocation1] sm:$0xff pattern:$0x75316420]
        %v517 = vld.sshfl [vmem:[#allocation1 + $0x8] sm:$0xff pattern:$0x75316420]
        %v518 = vld.sshfl [vmem:[#allocation1 + $0x10] sm:$0xff pattern:$0x75316420]
        %s524 = scalar_lea.vmem [#allocation1], 1
        %525 = vst [vmem:[%s524] ss:$2 sm:$0xff] %v417
        %s526 = scalar_lea.vmem [#allocation1], 17
        %527 = vst [vmem:[%s526] ss:$2 sm:$0xff] %v418
        %v528 = vld.sshfl [vmem:[#allocation1] sm:$0xff pattern:$0x75316420]
        %v529 = vld.sshfl [vmem:[#allocation1 + $0x8] sm:$0xff pattern:$0x75316420]
        %v530 = vld.sshfl [vmem:[#allocation1 + $0x10] sm:$0xff pattern:$0x75316420]
        %531 = vrot.lane.b32.xlu0 %v528, 127
        %v532 = vpop.permute.xlu0 %531
        %533 = vrot.lane.b32.xlu0 %v529, 127
        %v534 = vpop.permute.xlu0 %533
        %535 = vrot.lane.b32.xlu0 %v530, 127
        %v536 = vpop.permute.xlu0 %535
        %v537 = vsel %vm443, %v532, %v534
        %v538 = vsel %vm443, %v534, %v536
        %544 = vst [vmem:[#allocation1] ss:$2 sm:$0xff] %v432
        %s545 = scalar_lea.vmem [#allocation1], 16
        %546 = vst [vmem:[%s545] ss:$2 sm:$0xff] %v433
        %v547 = vld.sshfl [vmem:[#allocation1] sm:$0xff pattern:$0x75316420]
        %v548 = vld.sshfl [vmem:[#allocation1 + $0x8] sm:$0xff pattern:$0x75316420]
        %v549 = vld.sshfl [vmem:[#allocation1 + $0x10] sm:$0xff pattern:$0x75316420]
        %550 = vrot.lane.b32.xlu0 %v547, 126
        %v551 = vpop.permute.xlu0 %550
        %552 = vrot.lane.b32.xlu0 %v548, 126
        %v553 = vpop.permute.xlu0 %552
        %554 = vrot.lane.b32.xlu0 %v549, 126
        %v555 = vpop.permute.xlu0 %554
        %vm556 = vcmask 1031168
        %v557 = vsel %vm556, %v551, %v553
        %v558 = vsel %vm556, %v553, %v555
        %s564 = scalar_lea.vmem [#allocation1], 1
        %565 = vst [vmem:[%s564] ss:$2 sm:$0xff] %v447
        %s566 = scalar_lea.vmem [#allocation1], 17
        %567 = vst [vmem:[%s566] ss:$2 sm:$0xff] %v448
        %v568 = vld.sshfl [vmem:[#allocation1] sm:$0xff pattern:$0x75316420]
        %v569 = vld.sshfl [vmem:[#allocation1 + $0x8] sm:$0xff pattern:$0x75316420]
        %v570 = vld.sshfl [vmem:[#allocation1 + $0x10] sm:$0xff pattern:$0x75316420]
        %571 = vrot.lane.b32.xlu0 %v568, 112
        %v572 = vpop.permute.xlu0 %571
        %573 = vrot.lane.b32.xlu0 %v569, 112
        %v574 = vpop.permute.xlu0 %573
        %575 = vrot.lane.b32.xlu0 %v570, 112
        %v576 = vpop.permute.xlu0 %575
        %v577 = vsel %vm413, %v572, %v574
        %v578 = vsel %vm413, %v574, %v576
        %583 = vst [vmem:[#allocation1] ss:$2 sm:$0xff] %v384
        %v584 = vld.sshfl [vmem:[#allocation1] sm:$0xff pattern:$0x75316420]
        %v585 = vld.sshfl [vmem:[#allocation1 + $0x8] sm:$0xff pattern:$0x75316420]
        %586 = vrot.lane.b32.xlu0 %v584, 111
        %v587 = vpop.permute.xlu0 %586
        %588 = vrot.lane.b32.xlu0 %v585, 111
        %v589 = vpop.permute.xlu0 %588
        %v590 = vsel %vm398, %v587, %v589
        %s596 = scalar_lea.vmem [#allocation1], 1
        %597 = vst [vmem:[%s596] ss:$2 sm:$0xff] %v464
        %s598 = scalar_lea.vmem [#allocation1], 17
        %599 = vst [vmem:[%s598] ss:$2 sm:$0xff] %v465
        %v600 = vld.sshfl [vmem:[#allocation1] sm:$0xff pattern:$0x75316420]
        %v601 = vld.sshfl [vmem:[#allocation1 + $0x8] sm:$0xff pattern:$0x75316420]
        %v602 = vld.sshfl [vmem:[#allocation1 + $0x10] sm:$0xff pattern:$0x75316420]
        %603 = vrot.lane.b32.xlu0 %v600, 110
        %v604 = vpop.permute.xlu0 %603
        %605 = vrot.lane.b32.xlu0 %v601, 110
        %v606 = vpop.permute.xlu0 %605
        %607 = vrot.lane.b32.xlu0 %v602, 110
        %v608 = vpop.permute.xlu0 %607
        %vm609 = vcmask 900096
        %v610 = vsel %vm609, %v604, %v606
        %v611 = vsel %vm609, %v606, %v608
        %617 = vst [vmem:[#allocation1] ss:$2 sm:$0xff] %v479
        %s618 = scalar_lea.vmem [#allocation1], 16
        %619 = vst [vmem:[%s618] ss:$2 sm:$0xff] %v480
        %v620 = vld.sshfl [vmem:[#allocation1] sm:$0xff pattern:$0x75316420]
        %v621 = vld.sshfl [vmem:[#allocation1 + $0x8] sm:$0xff pattern:$0x75316420]
        %v622 = vld.sshfl [vmem:[#allocation1 + $0x10] sm:$0xff pattern:$0x75316420]
        %623 = vrot.lane.b32.xlu0 %v620, 96
        %v624 = vpop.permute.xlu0 %623
        %625 = vrot.lane.b32.xlu0 %v621, 96
        %v626 = vpop.permute.xlu0 %625
        %627 = vrot.lane.b32.xlu0 %v622, 96
        %v628 = vpop.permute.xlu0 %627
        %vm629 = vcmask 785408
        %v630 = vsel %vm629, %v624, %v626
        %v631 = vsel %vm629, %v626, %v628
        %s637 = scalar_lea.vmem [#allocation1], 1
        %638 = vst [vmem:[%s637] ss:$2 sm:$0xff] %v494
        %s639 = scalar_lea.vmem [#allocation1], 17
        %640 = vst [vmem:[%s639] ss:$2 sm:$0xff] %v495
        %v641 = vld.sshfl [vmem:[#allocation1] sm:$0xff pattern:$0x75316420]
        %v642 = vld.sshfl [vmem:[#allocation1 + $0x8] sm:$0xff pattern:$0x75316420]
        %v643 = vld.sshfl [vmem:[#allocation1 + $0x10] sm:$0xff pattern:$0x75316420]
        %644 = vrot.lane.b32.xlu0 %v641, 95
        %v645 = vpop.permute.xlu0 %644
        %646 = vrot.lane.b32.xlu0 %v642, 95
        %v647 = vpop.permute.xlu0 %646
        %648 = vrot.lane.b32.xlu0 %v643, 95
        %v649 = vpop.permute.xlu0 %648
        %vm650 = vcmask 777216
        %v651 = vsel %vm650, %v645, %v647
        %v652 = vsel %vm650, %v647, %v649
        %658 = vst [vmem:[#allocation1] ss:$2 sm:$0xff] %v509
        %s659 = scalar_lea.vmem [#allocation1], 16
        %660 = vst [vmem:[%s659] ss:$2 sm:$0xff] %v510
        %v661 = vld.sshfl [vmem:[#allocation1] sm:$0xff pattern:$0x75316420]
        %v662 = vld.sshfl [vmem:[#allocation1 + $0x8] sm:$0xff pattern:$0x75316420]
        %v663 = vld.sshfl [vmem:[#allocation1 + $0x10] sm:$0xff pattern:$0x75316420]
        %664 = vrot.lane.b32.xlu0 %v661, 94
        %v665 = vpop.permute.xlu0 %664
        %666 = vrot.lane.b32.xlu0 %v662, 94
        %v667 = vpop.permute.xlu0 %666
        %668 = vrot.lane.b32.xlu0 %v663, 94
        %v669 = vpop.permute.xlu0 %668
        %vm670 = vcmask 769024
        %v671 = vsel %vm670, %v665, %v667
        %v672 = vsel %vm670, %v667, %v669
        %v673 = vsel %vm393, %v516, %v537
        %v674 = vsel %vm393, %v517, %v538
        %v675 = vsel %vm393, %v518, %v536
        %v676 = vsel %vm393, %v557, %v577
        %v677 = vsel %vm393, %v558, %v578
        %v678 = vsel %vm393, %v555, %v576
        %v679 = vsel %vm393, %v587, %v604
        %v680 = vsel %vm393, %v590, %v610
        %v681 = vsel %vm393, %v589, %v611
        %v682 = vsel %vm393, %v624, %v645
        %v683 = vsel %vm393, %v630, %v651
        %v684 = vsel %vm393, %v631, %v652
        %v685 = vld [vmem:[#allocation7] sm:$0xff]
        %v686 = vld [vmem:[%s4] sm:$0xff]
        %688 = vset.pattern.permute.xlu0 0
        %689 = vperm.xlu0 %688, %v686
        %v690 = vpop.permute.xlu0 %689
        %704 = vrot.lane.b32.xlu0 %v673, 17
        %v705 = vpop.permute.xlu0 %704
        %706 = vrot.lane.b32.xlu0 %v674, 17
        %v707 = vpop.permute.xlu0 %706
        %708 = vrot.lane.b32.xlu0 %v675, 17
        %v709 = vpop.permute.xlu0 %708
        %710 = vrot.lane.b32.xlu0 %v676, 17
        %v711 = vpop.permute.xlu0 %710
        %712 = vrot.lane.b32.xlu0 %v677, 17
        %v713 = vpop.permute.xlu0 %712
        %714 = vrot.lane.b32.xlu0 %v678, 17
        %v715 = vpop.permute.xlu0 %714
        %716 = vrot.lane.b32.xlu0 %v679, 17
        %v717 = vpop.permute.xlu0 %716
        %718 = vrot.lane.b32.xlu0 %v680, 17
        %v719 = vpop.permute.xlu0 %718
        %720 = vrot.lane.b32.xlu0 %v681, 17
        %v721 = vpop.permute.xlu0 %720
        %722 = vrot.lane.b32.xlu0 %v682, 17
        %v723 = vpop.permute.xlu0 %722
        %724 = vrot.lane.b32.xlu0 %v683, 17
        %v725 = vpop.permute.xlu0 %724
        %726 = vrot.lane.b32.xlu0 %v684, 17
        %v727 = vpop.permute.xlu0 %726
        %728 = vrot.lane.b32.xlu0 %v665, 17
        %v729 = vpop.permute.xlu0 %728
        %730 = vrot.lane.b32.xlu0 %v671, 17
        %v731 = vpop.permute.xlu0 %730
        %732 = vrot.lane.b32.xlu0 %v672, 17
        %v733 = vpop.permute.xlu0 %732
        %v734 = vsel %vm505, %v705, %v707
        %v735 = vsel %vm505, %v707, %v709
        %v736 = vsel %vm505, %v711, %v713
        %v737 = vsel %vm505, %v713, %v715
        %v738 = vsel %vm505, %v717, %v719
        %v739 = vsel %vm505, %v719, %v721
        %v740 = vsel %vm505, %v723, %v725
        %v741 = vsel %vm505, %v725, %v727
        %v742 = vsel %vm505, %v729, %v731
        %v743 = vsel %vm505, %v731, %v733
        %vm752 = vcmask 293888
        %v754 = vsel %vm752, %v685, 0
        %v756 = vsel %vm393, %v742, 0
        %v758 = vsel %vm393, %v743, 0
        %760 = vmatpush.msra.mxu0 0.0
        %761 = vmatpush.msra.mxu0 0.0
        %762 = vmatpush.msra.mxu0 0.0
        %763 = vmatpush.msra.mxu0 0.0
        %764 = vmatpush.msra.mxu0 0.0
        %765 = vmatpush.msra.mxu0 0.0
        %766 = vmatpush.msra.mxu0 0.0
        %767 = vmatpush.msra.mxu0 0.0
        %768 = vmatpush.msra.mxu0 0.0
        %769 = vmatpush.msra.mxu0 0.0
        %770 = vmatpush.msra.mxu0 0.0
        %771 = vmatpush.msra.mxu0 %v756
        %772 = vmatpush.msra.mxu0 %v740
        %773 = vmatpush.msra.mxu0 %v738
        %774 = vmatpush.msra.mxu0 %v736
        %775 = vmatpush.msra.mxu0 %v734
        %776 = vmatmul.f32.gmra.mxu0 %v754
        %v777 = vpop.f32.mrf.mxu0
        %v778 = vadd.f32 %v690, %v777
        %779 = vdwg.mxu0
        %780 = vmatpush.msra.mxu0 0.0
        %781 = vmatpush.msra.mxu0 0.0
        %782 = vmatpush.msra.mxu0 0.0
        %783 = vmatpush.msra.mxu0 0.0
        %784 = vmatpush.msra.mxu0 0.0
        %785 = vmatpush.msra.mxu0 0.0
        %786 = vmatpush.msra.mxu0 0.0
        %787 = vmatpush.msra.mxu0 0.0
        %788 = vmatpush.msra.mxu0 0.0
        %789 = vmatpush.msra.mxu0 0.0
        %790 = vmatpush.msra.mxu0 0.0
        %791 = vmatpush.msra.mxu0 %v758
        %792 = vmatpush.msra.mxu0 %v741
        %793 = vmatpush.msra.mxu0 %v739
        %794 = vmatpush.msra.mxu0 %v737
        %795 = vmatpush.msra.mxu0 %v735
        %796 = vmatmul.f32.gmra.mxu0 %v754
        %v797 = vpop.f32.mrf.mxu0
        %v798 = vadd.f32 %v690, %v797
        %799 = vdwg.mxu0
        %v800 = vmax.f32 %v778, 0.0
        %v801 = vmax.f32 %v798, 0.0
        %802 = vst [vmem:[#allocation3 + $0x8] sm:$0xff] %v800
        %803 = vst [vmem:[#allocation3 + $0x10] sm:$0xff] %v801
        %v804 = vld [vmem:[#allocation3] sm:$0xff]
        %v805 = vld [vmem:[#allocation3 + $0x8] sm:$0xff]
        %v806 = vld [vmem:[#allocation3 + $0x10] sm:$0xff]
        %807 = vrot.lane.b32.xlu0 %v388, 111
        %v808 = vpop.permute.xlu0 %807
        %809 = vrot.lane.b32.xlu0 %v389, 111
        %v810 = vpop.permute.xlu0 %809
        %v811 = vsel %vm398, %v808, %v810
        %v815 = vmul.f32 %v804, %v808
        %v816 = vmul.f32 %v805, %v811
        %v817 = vmul.f32 %v806, %v810
        %818 = vrot.lane.b32.xlu0 %v404, 112
        %v819 = vpop.permute.xlu0 %818
        %820 = vrot.lane.b32.xlu0 %v405, 112
        %v821 = vpop.permute.xlu0 %820
        %v822 = vsel %vm413, %v819, %v821
        %v826 = vmul.f32 %v804, %v819
        %v827 = vmul.f32 %v805, %v822
        %v828 = vmul.f32 %v806, %v821
        %829 = vrot.lane.b32.xlu0 %v419, 113
        %v830 = vpop.permute.xlu0 %829
        %831 = vrot.lane.b32.xlu0 %v420, 113
        %v832 = vpop.permute.xlu0 %831
        %v833 = vsel %vm428, %v830, %v832
        %v837 = vmul.f32 %v804, %v830
        %v838 = vmul.f32 %v805, %v833
        %v839 = vmul.f32 %v806, %v832
        %840 = vrot.lane.b32.xlu0 %v434, 127
        %v841 = vpop.permute.xlu0 %840
        %842 = vrot.lane.b32.xlu0 %v435, 127
        %v843 = vpop.permute.xlu0 %842
        %v844 = vsel %vm443, %v841, %v843
        %v848 = vmul.f32 %v804, %v841
        %v849 = vmul.f32 %v805, %v844
        %v850 = vmul.f32 %v806, %v843
        %v851 = vld [vmem:[#allocation3 + $0x8] sm:$0xff]
        %v852 = vld [vmem:[#allocation3 + $0x10] sm:$0xff]
        %v853 = vld [vmem:[#allocation3 + $0x18] sm:$0xff]
        %854 = vrot.lane.b32.xlu0 %v451, 1
        %v855 = vpop.permute.xlu0 %854
        %856 = vrot.lane.b32.xlu0 %v452, 1
        %v857 = vpop.permute.xlu0 %856
        %v858 = vsel %vm460, %v855, %v857
        %v862 = vmul.f32 %v851, %v855
        %v863 = vmul.f32 %v852, %v858
        %v864 = vmul.f32 %v853, %v857
        %865 = vrot.lane.b32.xlu0 %v466, 15
        %v866 = vpop.permute.xlu0 %865
        %867 = vrot.lane.b32.xlu0 %v467, 15
        %v868 = vpop.permute.xlu0 %867
        %v869 = vsel %vm475, %v866, %v868
        %v873 = vmul.f32 %v851, %v866
        %v874 = vmul.f32 %v852, %v869
        %v875 = vmul.f32 %v853, %v868
        %876 = vrot.lane.b32.xlu0 %v481, 16
        %v877 = vpop.permute.xlu0 %876
        %878 = vrot.lane.b32.xlu0 %v482, 16
        %v879 = vpop.permute.xlu0 %878
        %v880 = vsel %vm490, %v877, %v879
        %v884 = vmul.f32 %v851, %v877
        %v885 = vmul.f32 %v852, %v880
        %v886 = vmul.f32 %v853, %v879
        %887 = vrot.lane.b32.xlu0 %v496, 17
        %v888 = vpop.permute.xlu0 %887
        %889 = vrot.lane.b32.xlu0 %v497, 17
        %v890 = vpop.permute.xlu0 %889
        %v891 = vsel %vm505, %v888, %v890
        %v895 = vmul.f32 %v851, %v888
        %v896 = vmul.f32 %v852, %v891
        %v897 = vmul.f32 %v853, %v890
        %901 = vrot.lane.b32.xlu0 %v826, 127
        %v902 = vpop.permute.xlu0 %901
        %903 = vrot.lane.b32.xlu0 %v827, 127
        %v904 = vpop.permute.xlu0 %903
        %905 = vrot.lane.b32.xlu0 %v828, 127
        %v906 = vpop.permute.xlu0 %905
        %v907 = vsel %vm443, %v902, %v904
        %v908 = vsel %vm443, %v904, %v906
        %912 = vrot.lane.b32.xlu0 %v837, 126
        %v913 = vpop.permute.xlu0 %912
        %914 = vrot.lane.b32.xlu0 %v838, 126
        %v915 = vpop.permute.xlu0 %914
        %916 = vrot.lane.b32.xlu0 %v839, 126
        %v917 = vpop.permute.xlu0 %916
        %v918 = vsel %vm556, %v913, %v915
        %v919 = vsel %vm556, %v915, %v917
        %923 = vrot.lane.b32.xlu0 %v848, 112
        %v924 = vpop.permute.xlu0 %923
        %925 = vrot.lane.b32.xlu0 %v849, 112
        %v926 = vpop.permute.xlu0 %925
        %927 = vrot.lane.b32.xlu0 %v850, 112
        %v928 = vpop.permute.xlu0 %927
        %v929 = vsel %vm413, %v924, %v926
        %v930 = vsel %vm413, %v926, %v928
        %933 = vrot.lane.b32.xlu0 %v800, 111
        %v934 = vpop.permute.xlu0 %933
        %935 = vrot.lane.b32.xlu0 %v801, 111
        %v936 = vpop.permute.xlu0 %935
        %v937 = vsel %vm398, %v934, %v936
        %941 = vrot.lane.b32.xlu0 %v862, 110
        %v942 = vpop.permute.xlu0 %941
        %943 = vrot.lane.b32.xlu0 %v863, 110
        %v944 = vpop.permute.xlu0 %943
        %945 = vrot.lane.b32.xlu0 %v864, 110
        %v946 = vpop.permute.xlu0 %945
        %v947 = vsel %vm609, %v942, %v944
        %v948 = vsel %vm609, %v944, %v946
        %952 = vrot.lane.b32.xlu0 %v873, 96
        %v953 = vpop.permute.xlu0 %952
        %954 = vrot.lane.b32.xlu0 %v874, 96
        %v955 = vpop.permute.xlu0 %954
        %956 = vrot.lane.b32.xlu0 %v875, 96
        %v957 = vpop.permute.xlu0 %956
        %v958 = vsel %vm629, %v953, %v955
        %v959 = vsel %vm629, %v955, %v957
        %963 = vrot.lane.b32.xlu0 %v884, 95
        %v964 = vpop.permute.xlu0 %963
        %965 = vrot.lane.b32.xlu0 %v885, 95
        %v966 = vpop.permute.xlu0 %965
        %967 = vrot.lane.b32.xlu0 %v886, 95
        %v968 = vpop.permute.xlu0 %967
        %v969 = vsel %vm650, %v964, %v966
        %v970 = vsel %vm650, %v966, %v968
        %974 = vrot.lane.b32.xlu0 %v895, 94
        %v975 = vpop.permute.xlu0 %974
        %976 = vrot.lane.b32.xlu0 %v896, 94
        %v977 = vpop.permute.xlu0 %976
        %978 = vrot.lane.b32.xlu0 %v897, 94
        %v979 = vpop.permute.xlu0 %978
        %v980 = vsel %vm670, %v975, %v977
        %v981 = vsel %vm670, %v977, %v979
        %983 = vst [vmem:[#allocation1] ss:$2 sm:$0xff] %v353
        %v984 = vld.sshfl [vmem:[#allocation1] sm:$0xff pattern:$0x75316420]
        %v985 = vld.sshfl [vmem:[#allocation1 + $0x8] sm:$0xff pattern:$0x75316420]
        %986 = vrot.lane.b32.xlu0 %v984, 111
        %v987 = vpop.permute.xlu0 %986
        %988 = vrot.lane.b32.xlu0 %v985, 111
        %v989 = vpop.permute.xlu0 %988
        %v990 = vsel %vm398, %v987, %v989
        %v991 = vld [vmem:[#allocation9] sm:$0xff]
        %v992 = vld [vmem:[%s7] sm:$0xff]
        %994 = vset.pattern.permute.xlu0 0
        %995 = vperm.xlu0 %994, %v992
        %v996 = vpop.permute.xlu0 %995
        %1001 = vrot.lane.b32.xlu0 %v815, 17
        %v1002 = vpop.permute.xlu0 %1001
        %1003 = vrot.lane.b32.xlu0 %v816, 17
        %v1004 = vpop.permute.xlu0 %1003
        %1005 = vrot.lane.b32.xlu0 %v817, 17
        %v1006 = vpop.permute.xlu0 %1005
        %1007 = vrot.lane.b32.xlu0 %v907, 17
        %v1008 = vpop.permute.xlu0 %1007
        %1009 = vrot.lane.b32.xlu0 %v908, 17
        %v1010 = vpop.permute.xlu0 %1009
        %1011 = vrot.lane.b32.xlu0 %v906, 17
        %v1012 = vpop.permute.xlu0 %1011
        %1013 = vrot.lane.b32.xlu0 %v918, 17
        %v1014 = vpop.permute.xlu0 %1013
        %1015 = vrot.lane.b32.xlu0 %v919, 17
        %v1016 = vpop.permute.xlu0 %1015
        %1017 = vrot.lane.b32.xlu0 %v917, 17
        %v1018 = vpop.permute.xlu0 %1017
        %1019 = vrot.lane.b32.xlu0 %v929, 17
        %v1020 = vpop.permute.xlu0 %1019
        %1021 = vrot.lane.b32.xlu0 %v930, 17
        %v1022 = vpop.permute.xlu0 %1021
        %1023 = vrot.lane.b32.xlu0 %v928, 17
        %v1024 = vpop.permute.xlu0 %1023
        %1025 = vrot.lane.b32.xlu0 %v934, 17
        %v1026 = vpop.permute.xlu0 %1025
        %1027 = vrot.lane.b32.xlu0 %v937, 17
        %v1028 = vpop.permute.xlu0 %1027
        %1029 = vrot.lane.b32.xlu0 %v936, 17
        %v1030 = vpop.permute.xlu0 %1029
        %1031 = vrot.lane.b32.xlu0 %v942, 17
        %v1032 = vpop.permute.xlu0 %1031
        %1033 = vrot.lane.b32.xlu0 %v947, 17
        %v1034 = vpop.permute.xlu0 %1033
        %1035 = vrot.lane.b32.xlu0 %v948, 17
        %v1036 = vpop.permute.xlu0 %1035
        %1037 = vrot.lane.b32.xlu0 %v953, 17
        %v1038 = vpop.permute.xlu0 %1037
        %1039 = vrot.lane.b32.xlu0 %v958, 17
        %v1040 = vpop.permute.xlu0 %1039
        %1041 = vrot.lane.b32.xlu0 %v959, 17
        %v1042 = vpop.permute.xlu0 %1041
        %1043 = vrot.lane.b32.xlu0 %v964, 17
        %v1044 = vpop.permute.xlu0 %1043
        %1045 = vrot.lane.b32.xlu0 %v969, 17
        %v1046 = vpop.permute.xlu0 %1045
        %1047 = vrot.lane.b32.xlu0 %v970, 17
        %v1048 = vpop.permute.xlu0 %1047
        %1049 = vrot.lane.b32.xlu0 %v975, 17
        %v1050 = vpop.permute.xlu0 %1049
        %1051 = vrot.lane.b32.xlu0 %v980, 17
        %v1052 = vpop.permute.xlu0 %1051
        %1053 = vrot.lane.b32.xlu0 %v981, 17
        %v1054 = vpop.permute.xlu0 %1053
        %1055 = vrot.lane.b32.xlu0 %v987, 17
        %v1056 = vpop.permute.xlu0 %1055
        %1057 = vrot.lane.b32.xlu0 %v990, 17
        %v1058 = vpop.permute.xlu0 %1057
        %1059 = vrot.lane.b32.xlu0 %v989, 17
        %v1060 = vpop.permute.xlu0 %1059
        %v1061 = vsel %vm505, %v1002, %v1004
        %v1062 = vsel %vm505, %v1004, %v1006
        %v1063 = vsel %vm505, %v1008, %v1010
        %v1064 = vsel %vm505, %v1010, %v1012
        %v1065 = vsel %vm505, %v1014, %v1016
        %v1066 = vsel %vm505, %v1016, %v1018
        %v1067 = vsel %vm505, %v1020, %v1022
        %v1068 = vsel %vm505, %v1022, %v1024
        %v1069 = vsel %vm505, %v1026, %v1028
        %v1070 = vsel %vm505, %v1028, %v1030
        %v1071 = vsel %vm505, %v1032, %v1034
        %v1072 = vsel %vm505, %v1034, %v1036
        %v1073 = vsel %vm505, %v1038, %v1040
        %v1074 = vsel %vm505, %v1040, %v1042
        %v1075 = vsel %vm505, %v1044, %v1046
        %v1076 = vsel %vm505, %v1046, %v1048
        %v1077 = vsel %vm505, %v1050, %v1052
        %v1078 = vsel %vm505, %v1052, %v1054
        %v1079 = vsel %vm505, %v1056, %v1058
        %v1080 = vsel %vm505, %v1058, %v1060
        %vm1099 = vcmask 621568
        %v1101 = vsel %vm1099, %v991, 0
        %v1103 = vsel %vm393, %v1079, 0
        %v1105 = vsel %vm393, %v1080, 0
        %1107 = vmatpush.msra.mxu0 0.0
        %1108 = vmatpush.msra.mxu0 0.0
        %1109 = vmatpush.msra.mxu0 0.0
        %1110 = vmatpush.msra.mxu0 0.0
        %1111 = vmatpush.msra.mxu0 0.0
        %1112 = vmatpush.msra.mxu0 0.0
        %1113 = vmatpush.msra.mxu0 %v1103
        %1114 = vmatpush.msra.mxu0 %v1077
        %1115 = vmatpush.msra.mxu0 %v1075
        %1116 = vmatpush.msra.mxu0 %v1073
        %1117 = vmatpush.msra.mxu0 %v1071
        %1118 = vmatpush.msra.mxu0 %v1069
        %1119 = vmatpush.msra.mxu0 %v1067
        %1120 = vmatpush.msra.mxu0 %v1065
        %1121 = vmatpush.msra.mxu0 %v1063
        %1122 = vmatpush.msra.mxu0 %v1061
        %1123 = vmatmul.f32.gmra.mxu0 %v1101
        %v1124 = vpop.f32.mrf.mxu0
        %v1125 = vadd.f32 %v996, %v1124
        %1126 = vdwg.mxu0
        %1127 = vmatpush.msra.mxu0 0.0
        %1128 = vmatpush.msra.mxu0 0.0
        %1129 = vmatpush.msra.mxu0 0.0
        %1130 = vmatpush.msra.mxu0 0.0
        %1131 = vmatpush.msra.mxu0 0.0
        %1132 = vmatpush.msra.mxu0 0.0
        %1133 = vmatpush.msra.mxu0 %v1105
        %1134 = vmatpush.msra.mxu0 %v1078
        %1135 = vmatpush.msra.mxu0 %v1076
        %1136 = vmatpush.msra.mxu0 %v1074
        %1137 = vmatpush.msra.mxu0 %v1072
        %1138 = vmatpush.msra.mxu0 %v1070
        %1139 = vmatpush.msra.mxu0 %v1068
        %1140 = vmatpush.msra.mxu0 %v1066
        %1141 = vmatpush.msra.mxu0 %v1064
        %1142 = vmatpush.msra.mxu0 %v1062
        %1143 = vmatmul.f32.gmra.mxu0 %v1101
        %v1144 = vpop.f32.mrf.mxu0
        %v1145 = vadd.f32 %v996, %v1144
        %1146 = vdwg.mxu0
        %1147 = vst [vmem:[%s352] sm:$0xff] %v1125
        %1148 = vst [vmem:[%s352 + $0x8] sm:$0xff] %v1145
        %s1149 = sand.u32 %s207, 1
        %s1150 = scalar_lea.sflag [#allocation6], %s1149
        %s1151 = sand.u32 %s207, 1
        %s1152 = smul.addr %s1151, 16
        %s1153 = scalar_lea.vmem [#allocation10], %s1152
        // Predicated region
        $region65: #{tpu_custom_call.1} parent=51 // pred_check
          %p1154 = pneg %p217
        $region66: #{tpu_custom_call.1} parent=51 // pred_check_branch
          %1156 = sbr.rel (%p1154) target = $region68
        $region67: #{tpu_custom_call.1} parent=51 // pred_region
          %1158 = vsyncadd %s1150, 0
          %s1159 = smul.addr %s26, 2
          %s1160 = smul.addr %s1159, 8
          %s1161 = scalar_lea.hbm %s8, %s1160
          %s1163 = sshll.u32 %s1153, 4
          %s1164 = int_to_ptr.vmem [resolvable:$true] %s1163
          %s1165 = sshll.u32 %s1161, 4
          %s1166 = int_to_ptr.hbm [resolvable:$true] %s1165
          %1168 = dma.vmem_to_hbm [thread:$0]  %s1164, 256, %s1166, %s1150
        $region68: #{tpu_custom_call.1} parent=51 // pred_fallthru
          _
      $region52: #{tpu_custom_call.1} parent=5 // pred_fallthru
        _
      %p1169 = scmp.le.s32.totalorder 2, %s21
      // Predicated region
      $region69: #{tpu_custom_call.1} parent=5 // pred_check
        %p1170 = pneg %p1169
      $region70: #{tpu_custom_call.1} parent=5 // pred_check_branch
        %1172 = sbr.rel (%p1170) target = $region72
      $region71: #{tpu_custom_call.1} parent=5 // pred_region
        %s1173 = ssub.s32 %s21, 2
        // Predicated region
        $region73: #{tpu_custom_call.1} parent=71 // pred_check
          %p1174 = pneg %p223
        $region74: #{tpu_custom_call.1} parent=71 // pred_check_branch
          %1176 = sbr.rel (%p1174) target = $region76
        $region75: #{tpu_custom_call.1} parent=71 // pred_region
          %s1177 = sand.u32 %s208, 1
          %s1178 = scalar_lea.sflag [#allocation6], %s1177
          %s1179 = sand.u32 %s208, 1
          %s1180 = smul.addr %s1179, 16
          %s1181 = scalar_lea.vmem [#allocation10], %s1180
          %1183 = dma.done %s1178, 256
        $region76: #{tpu_custom_call.1} parent=71 // pred_fallthru
          _
      $region72: #{tpu_custom_call.1} parent=5 // pred_fallthru
        _
    $region6: #{tpu_custom_call.1} parent=1 // loop_footer
      %s25 = sadd.s32 1, %s21
    $region7: #{tpu_custom_call.1} parent=1 // loop_footer_branch
      %20 = sbr.rel target = $region3
    $region8: #{tpu_custom_call.1} parent=1 // loop_exit
      _
    %1184 = vsyncpa [#allocation5], 1
    %s1185 = scalar_lea.sflag [#allocation5], 1
    %1186 = vsyncpa %s1185, 1
    %1187 = vsyncpa [#allocation8], 1
    %1188 = vsyncpa [#allocation6], 1
    %s1189 = scalar_lea.sflag [#allocation6], 1
    %1190 = vsyncpa %s1189, 1

</llo_original>
